<compile_context>
chip_gen: v7x
topology: tpu7x:2x2x1
jax: 0.10.0
libtpu: 0.0.40
codegen_flags: <defaults>
</compile_context>

<pallas_src>
import numpy as np
import jax
import jax.numpy as jnp
from jax.experimental import pallas as pl
from jax.experimental.pallas import tpu as pltpu


# ----------------------------------------------------------------------------
# Host-side parameter construction (numpy; mirrors the PyTorch __init__).
# ----------------------------------------------------------------------------
def make_window(seed):
    """Build the (H, L) regression window from delta coefficient lists."""
    # TODO(synk): integer-width seeds (auto-generated regression coefficients)
    # are not implemented; only explicit delta-coefficient lists are supported.
    rows = [[1.0]] + [list(map(float, c)) for c in seed]
    max_len = max(len(r) for r in rows)
    if max_len % 2 == 0:
        max_len += 1
    window = np.zeros((len(rows), max_len), dtype=np.float64)
    for i, r in enumerate(rows):
        diff = max_len - len(r)
        window[i, diff // 2: diff // 2 + len(r)] = r
    return window


def build_mlpg_matrix(size, seed):
    """Replicates MaximumLikelihoodParameterGeneration.__init__ (global unit
    variance).  Returns (M, H) with M float64 of shape (T, T*H)."""
    assert 1 <= size
    seed = [list(s) for s in seed]
    window = make_window(seed)
    if isinstance(seed[0], (tuple, list)):
        th = [0] + [len(coefficients) // 2 for coefficients in seed]
    else:
        th = [0] + list(seed)
    th = np.expand_dims(np.asarray(th), 1)

    H, L = window.shape
    N = (L - 1) // 2
    T = size
    W = np.zeros((T * H, T), dtype=np.float64)
    for t in range(T):
        hs = H * t
        he = hs + H
        ts = t - N
        te = ts + L
        if ts < 0:
            W[hs:he, :te] = window[:, -ts:] * (th <= t)
        elif T < te:
            W[hs:he, ts:] = window[:, : T - ts] * (th < T - t)
        else:
            W[hs:he, ts:te] = window
    WS = W.T
    WSW = np.matmul(WS, W)
    WSW = np.linalg.inv(WSW)
    # TODO(synk): for very long T a banded Cholesky solve of (W^T W) c = W^T u
    # would avoid materializing the dense O(T^2 * H) matrix M entirely.
    M = np.matmul(WSW, WS)  # (T, T*H)
    return M, H


# ----------------------------------------------------------------------------
# Tiling helpers
# ----------------------------------------------------------------------------
def _round_up(x, m):
    return ((x + m - 1) // m) * m


def _choose_tile(extent, *, mult, min_tile, max_tile, prefer_two_tiles=False):
    """Pick a tile size (multiple of `mult`) for one matmul dimension.

    Minimizes padding waste first; at equal waste prefers >= 2 tiles (so v7x's
    two TensorCores both get work) when requested, then the larger tile
    (fewer grid steps)."""
    ext = _round_up(extent, mult)
    if ext <= max(min_tile, mult):
        return ext
    hi = min(max_tile, ext)
    lo = min(min_tile, hi)
    best_key, best_tile = None, hi
    t = lo
    while t <= hi:
        padded = _round_up(ext, t)
        waste = padded - ext
        ntiles = padded // t
        split_penalty = 0 if (not prefer_two_tiles or ntiles >= 2) else 1
        key = (waste, split_penalty, -t)
        if best_key is None or key < best_key:
            best_key, best_tile = key, t
        t += mult
    return best_tile


# ----------------------------------------------------------------------------
# Pallas kernels
# ----------------------------------------------------------------------------
def _mlpg_kernel_fused(m_ref, u_ref, o_ref):
    """Single MXU pass over the full (padded) K dimension; no accumulator."""
    o_ref[...] = jnp.dot(
        m_ref[...], u_ref[...], preferred_element_type=jnp.float32
    ).astype(o_ref.dtype)


def _make_mlpg_kernel_ktiled(tk, u_resident):
    """K-tiled kernel with an f32 VMEM accumulator.

    If `u_resident`, the U ref holds the full (K_pad, tn) panel (resident in
    VMEM across the whole k reduction) and the per-step k-chunk is sliced in
    the kernel instead of being re-DMA'd for every row tile."""

    def kernel(m_ref, u_ref, o_ref, acc_ref):
        k = pl.program_id(2)

        @pl.when(k == 0)
        def _init():
            acc_ref[...] = jnp.zeros_like(acc_ref)

        if u_resident:
            ks = pl.multiple_of(k * tk, tk)
            u_blk = u_ref[pl.ds(ks, tk), :]
        else:
            u_blk = u_ref[...]

        acc_ref[...] += jnp.dot(m_ref[...], u_blk,
                                preferred_element_type=jnp.float32)

        @pl.when(k == pl.num_programs(2) - 1)
        def _finalize():
            o_ref[...] = acc_ref[...].astype(o_ref.dtype)

    return kernel


# ----------------------------------------------------------------------------
# Construction-time preparation (pad + cast M once) and the forward wrapper.
# ----------------------------------------------------------------------------
_VMEM_LIMIT_BYTES = 48 * 1024 * 1024    # OK on v5e/v6e; under v7x's 64 MiB VMEM
_VMEM_BUDGET_BYTES = 40 * 1024 * 1024   # working-set budget used for path choice


def prepare_mlpg(size, seed=((-0.5, 0, 0.5), (1, -2, 1)), compute_dtype=None):
    """Build the MLPG matrix once, pick T/K tiles, and pre-pad + pre-cast M.

    Doing the pad/cast here (instead of per forward call) removes a full HBM
    read+write of the (T, T*H) matrix from every forward call."""
    M_np, H = build_mlpg_matrix(size, seed)
    T = size
    TH = T * H

    store_dtype = jnp.dtype(jnp.float32 if compute_dtype is None else compute_dtype)
    # Sub-32-bit dtypes pack rows along sublanes -> use 16-row granularity.
    row_mult = 16 if store_dtype.itemsize < 4 else 8

    ext_t = _round_up(T, row_mult)
    tm = _choose_tile(T, mult=row_mult, min_tile=128, max_tile=256,
                      prefer_two_tiles=True)
    T_pad = _round_up(ext_t, tm)

    ext_k = _round_up(TH, 128)
    tk = _choose_tile(TH, mult=128, min_tile=256, max_tile=1024)
    K_pad = _round_up(ext_k, tk)

    Mp = np.zeros((T_pad, K_pad), dtype=np.float64)
    Mp[:T, :TH] = M_np
    Mp = jnp.asarray(Mp, dtype=store_dtype)   # pre-padded + pre-cast, once

    return dict(Mp=Mp, M_np=M_np, H=H, T=T, tm=tm, tk=tk,
                T_pad=T_pad, K_pad=K_pad)


def mlpg_forward(mean, params, *, path="auto", tk=None,
                 vmem_budget_bytes=_VMEM_BUDGET_BYTES):
    """mean: (..., T, D*H) -> c: (..., T, D)."""
    Mp = params["Mp"]
    H, T = params["H"], params["T"]
    T_pad, K_pad = params["T_pad"], params["K_pad"]
    tm = params["tm"]
    tk = params["tk"] if tk is None else tk
    assert T_pad % tm == 0 and K_pad % tk == 0

    *lead, Tm, DH = mean.shape
    assert Tm == T, "time axis must match the construction-time size"
    assert DH % H == 0, "feature dim must be D*H"
    D = DH // H
    B = int(np.prod(lead)) if lead else 1
    TH = T * H
    BD = B * D
    out_dtype = mean.dtype

    # (..., T, D*H) -> (B, T*H, D) -> (T*H, B*D): fold batch + static dim into
    # the lane dimension so one matmul C = M @ U covers the whole batch.
    u = mean.reshape(B, TH, D)
    u = jnp.transpose(u, (1, 0, 2)).reshape(TH, BD)
    if u.dtype != Mp.dtype:
        u = u.astype(Mp.dtype)

    tn = _choose_tile(BD, mult=128, min_tile=128, max_tile=512)
    N_pad = _round_up(_round_up(BD, 128), tn)
    Up = jnp.pad(u, ((0, K_pad - TH), (0, N_pad - BD)))

    m_item = Mp.dtype.itemsize
    u_item = Up.dtype.itemsize
    o_item = jnp.dtype(out_dtype).itemsize

    # VMEM working-set estimates (double-buffered inputs/outputs + f32 acc),
    # budgeted to stay safely under v7x's 64 MiB per-TensorCore VMEM.
    out_bytes = 2 * tm * tn * o_item
    acc_bytes = tm * tn * 4
    fused_ws = 2 * tm * K_pad * m_item + 2 * K_pad * tn * u_item + out_bytes
    resident_ws = (2 * tm * tk * m_item + 2 * K_pad * tn * u_item
                   + acc_bytes + out_bytes)

    if path == "auto":
        if K_pad == tk or fused_ws <= vmem_budget_bytes:
            path = "fused"
        elif resident_ws <= vmem_budget_bytes:
            path = "resident"
        else:
            path = "tiled"
    if path not in ("fused", "resident", "tiled"):
        raise ValueError(f"unknown path: {path}")

    cost = pl.CostEstimate(
        flops=2 * T_pad * K_pad * N_pad,
        bytes_accessed=(T_pad * K_pad * m_item + K_pad * N_pad * u_item
                        + T_pad * N_pad * o_item),
        transcendentals=0,
    )
    out_shape = jax.ShapeDtypeStruct((T_pad, N_pad), out_dtype)

    if path == "fused":
        c_pad = pl.pallas_call(
            _mlpg_kernel_fused,
            out_shape=out_shape,
            grid_spec=pltpu.PrefetchScalarGridSpec(
                num_scalar_prefetch=0,
                grid=(T_pad // tm, N_pad // tn),
                in_specs=[
                    pl.BlockSpec((tm, K_pad), lambda i, j: (i, 0)),   # M row panel
                    pl.BlockSpec((K_pad, tn), lambda i, j: (0, j)),   # U resident
                ],
                out_specs=pl.BlockSpec((tm, tn), lambda i, j: (i, j)),
            ),
            compiler_params=pltpu.CompilerParams(
                dimension_semantics=("parallel", "parallel"),
                vmem_limit_bytes=_VMEM_LIMIT_BYTES),
            cost_estimate=cost,
        )(Mp, Up)
    else:
        u_resident = path == "resident"
        if u_resident:
            u_spec = pl.BlockSpec((K_pad, tn), lambda i, j, k: (0, j))
        else:
            u_spec = pl.BlockSpec((tk, tn), lambda i, j, k: (k, j))
        c_pad = pl.pallas_call(
            _make_mlpg_kernel_ktiled(tk, u_resident),
            out_shape=out_shape,
            grid_spec=pltpu.PrefetchScalarGridSpec(
                num_scalar_prefetch=0,
                grid=(T_pad // tm, N_pad // tn, K_pad // tk),
                in_specs=[
                    pl.BlockSpec((tm, tk), lambda i, j, k: (i, k)),   # M tile
                    u_spec,
                ],
                out_specs=pl.BlockSpec((tm, tn), lambda i, j, k: (i, j)),
                scratch_shapes=[pltpu.VMEM((tm, tn), jnp.float32)],
            ),
            compiler_params=pltpu.CompilerParams(
                dimension_semantics=("parallel", "parallel", "arbitrary"),
                vmem_limit_bytes=_VMEM_LIMIT_BYTES),
            cost_estimate=cost,
        )(Mp, Up)

    # (T_pad, N_pad) -> (T, B*D) -> (B, T, D) -> (*lead, T, D)
    c = c_pad[:T, :BD].reshape(T, B, D)
    c = jnp.transpose(c, (1, 0, 2))
    return c.reshape(*lead, T, D)


class MaximumLikelihoodParameterGeneration:
    """Pallas-TPU analogue of the PyTorch module (global unit variance)."""

    def __init__(self, size, seed=((-0.5, 0, 0.5), (1, -2, 1)),
                 compute_dtype=None):
        self.params = prepare_mlpg(size, seed, compute_dtype=compute_dtype)
        self.H = self.params["H"]
        self.M_np = self.params["M_np"]

    def __call__(self, mean, **kwargs):
        return mlpg_forward(mean, self.params, **kwargs)


# ----------------------------------------------------------------------------
# Reference (float64 numpy, matches the PyTorch einsum semantics).
# ----------------------------------------------------------------------------
def mlpg_reference(mean, M_np, H):
    mean64 = np.asarray(mean, np.float64)
    lead = mean64.shape[:-2]
    T, DH = mean64.shape[-2], mean64.shape[-1]
    D = DH // H
    u = mean64.reshape(*lead, T * H, D)
    return np.einsum("...Td,tT->...td", u, M_np)


# ----------------------------------------------------------------------------
# Demo / correctness checks
# ----------------------------------------------------------------------------
if __name__ == "__main__":
    seed = [[-0.5, 0.0, 0.5], [1.0, -2.0, 1.0]]
    key = jax.random.PRNGKey(0)
    k1, k2 = jax.random.split(key, 2)

    # --- Test 1: small batch, f32, fused single-matmul path -----------------
    B, T, D = 2, 8, 4
    mlpg = MaximumLikelihoodParameterGeneration(T, seed)
    H = mlpg.H
    mean = jax.random.normal(k1, (B, T, D * H), dtype=jnp.float32)
    c = jax.block_until_ready(mlpg(mean))
    assert c.shape == (B, T, D)
    c_ref = mlpg_reference(mean, mlpg.M_np, H)
    np.testing.assert_allclose(np.asarray(c), c_ref, rtol=1e-4, atol=1e-4)

    # --- Tests 2/3: leading batch dims + forced k-tiled kernels -------------
    T2, D2 = 64, 2
    mlpg2 = MaximumLikelihoodParameterGeneration(T2, seed)
    mean2 = jax.random.normal(k2, (2, 3, T2, D2 * H), dtype=jnp.float32)
    c_ref2 = mlpg_reference(mean2, mlpg2.M_np, H)
    for forced_path in ("resident", "tiled"):
        c2 = jax.block_until_ready(mlpg2(mean2, path=forced_path, tk=128))
        assert c2.shape == (2, 3, T2, D2)
        np.testing.assert_allclose(np.asarray(c2), c_ref2, rtol=1e-4, atol=1e-4)

    # --- Test 4: bf16 compute dtype (f32 accumulation in-kernel) ------------
    mlpg_bf = MaximumLikelihoodParameterGeneration(T, seed,
                                                   compute_dtype=jnp.bfloat16)
    c_bf = jax.block_until_ready(mlpg_bf(mean))
    TH = T * H
    M_bf = np.asarray(mlpg_bf.params["Mp"][:T, :TH].astype(jnp.float32))
    u_bf = np.asarray(mean.astype(jnp.bfloat16).astype(jnp.float32))
    u_bf = u_bf.reshape(B, TH, D)
    c_bf_ref = np.einsum("bTd,tT->btd", u_bf, M_bf)
    np.testing.assert_allclose(np.asarray(c_bf), c_bf_ref, rtol=1e-2, atol=1e-2)

    print("KERNEL_OK")
</pallas_src>

<mosaic_0001>
module attributes {stable_mosaic.version = 11 : i64} {
  func.func @_mlpg_kernel_fused(%arg0: i32, %arg1: i32, %arg2: memref<8x128xf32, #tpu.memory_space<vmem>>, %arg3: memref<128x128xf32, #tpu.memory_space<vmem>>, %arg4: memref<8x128xf32, #tpu.memory_space<vmem>>) attributes {dimension_semantics = [#tpu.dimension_semantics<parallel>, #tpu.dimension_semantics<parallel>], iteration_bounds = array<i64: 1, 1>, scalar_prefetch = 0 : i64, scratch_operands = 0 : i64, tpu.core_type = #tpu.core_type<tc>, window_params = [{transform_indices = @transform_0, window_bounds = array<i64: 8, 128>}, {transform_indices = @transform_1, window_bounds = array<i64: 128, 128>}, {transform_indices = @transform_2, window_bounds = array<i64: 8, 128>}]} {
    %c0 = arith.constant 0 : index
    %c0_0 = arith.constant 0 : index
    %0 = vector.load %arg2[%c0, %c0_0] : memref<8x128xf32, #tpu.memory_space<vmem>>, vector<8x128xf32>
    %c0_1 = arith.constant 0 : index
    %c0_2 = arith.constant 0 : index
    %1 = vector.load %arg3[%c0_1, %c0_2] : memref<128x128xf32, #tpu.memory_space<vmem>>, vector<128x128xf32>
    %cst = arith.constant dense<0.000000e+00> : vector<8x128xf32>
    %2 = tpu.matmul %0, %1, %cst {dimension_numbers = #tpu.dot_dimension_numbers<[1], [0], [0], [1], [0, 0, 1, 1], [], []>} : vector<8x128xf32>, vector<128x128xf32>, vector<8x128xf32> -> vector<8x128xf32>
    %c0_3 = arith.constant 0 : index
    %c0_4 = arith.constant 0 : index
    %3 = vector.load %arg4[%c0_3, %c0_4] : memref<8x128xf32, #tpu.memory_space<vmem>>, vector<8x128xf32>
    tpu.vector_store %arg4[%c0_3, %c0_4], %2 {strides = array<i32>} : memref<8x128xf32, #tpu.memory_space<vmem>>, vector<8x128xf32>,
    return
  }
  func.func @transform_0(%arg0: i32, %arg1: i32) -> (i32, i32) {
    %c0_i32 = arith.constant 0 : i32
    %c0_i32_0 = arith.constant 0 : i32
    return %arg0, %c0_i32 : i32, i32
  }
  func.func @transform_1(%arg0: i32, %arg1: i32) -> (i32, i32) {
    %c0_i32 = arith.constant 0 : i32
    %c0_i32_0 = arith.constant 0 : i32
    return %c0_i32, %arg1 : i32, i32
  }
  func.func @transform_2(%arg0: i32, %arg1: i32) -> (i32, i32) {
    %c0_i32 = arith.constant 0 : i32
    return %arg0, %arg1 : i32, i32
  }
}

</mosaic_0001>

<llo_original>
// kernel: tpu_custom_call.1
$region0: #{tpu_custom_call.1}
  #allocation0 [shape = 'u32[]', space=smem, size = 0x4, offset = 0x4, fixed_abs, tag = 'smem constant byte address 0x4 - core index']
  #allocation1 [shape = 'u32[144,128]{1,0:T(1,128)}', space=vmem, size = 0x12000, scoped, tag = 'internal scratch']
  %s0 = inlined_call_operand.hbm [shape: f32[8,128], index: 0, kind: input, shape index: {}]
  %s1 = inlined_call_operand.hbm [shape: f32[128,128], index: 1, kind: input, shape index: {}]
  %s2 = inlined_call_operand.hbm [shape: f32[8,128], index: 2, kind: output, shape index: {}]
  %s3 = sld [smem:[#allocation0]]
  $region26: #{tpu_custom_call.1} parent=0
    _
  %s5 = ssub.s32 1, %s3
  %s6 = scalar_select 0, %s5, %s3
  $region1: #{tpu_custom_call.1} parent=0
    #allocation2 [shape = 'u8[4096]{0}', space=vmem, size = 0x1000, scoped, tag = 'input window, operand 0, single buffered']
    #allocation3 [shape = 's32[1]{0}', space=sflag, size = 0x4, scoped, tag = 'scoped memory for tpu_custom_call.1']
    #allocation4 [shape = 's32[1]{0}', space=sflag, size = 0x4, scoped, tag = 'scoped memory for tpu_custom_call.1']
    #allocation5 [shape = 'u8[65536]{0}', space=vmem, size = 0x10000, scoped, tag = 'input window, operand 1, single buffered']
    #allocation6 [shape = 's32[1]{0}', space=sflag, size = 0x4, scoped, tag = 'scoped memory for tpu_custom_call.1']
    #allocation7 [shape = 'u8[4096]{0}', space=vmem, size = 0x1000, scoped, tag = 'output window, operand 0, single buffered']
    %7 = vsyncpa [#allocation3], 0
    %8 = vsyncpa [#allocation6], 0
    %9 = vsyncpa [#allocation4], 0
    // Predicated region
    $region2: #{tpu_custom_call.1} parent=1 // pred_check
      _
    $region3: #{tpu_custom_call.1} parent=1 // pred_check_branch
      %11 = sbr.rel (0) target = $region5
    $region4: #{tpu_custom_call.1} parent=1 // pred_region
      %s13 = ssub.s32 128, 128
      %14 = vsyncadd [#allocation3], %s13
      %s16 = sshll.u32 [#allocation2], 4
      %s17 = int_to_ptr.vmem [resolvable:$true] %s16
      %19 = dma.hbm_to_vmem [thread:$0]  %s0, 128, %s17, [#allocation3]
    $region5: #{tpu_custom_call.1} parent=1 // pred_fallthru
      _
    // Predicated region
    $region6: #{tpu_custom_call.1} parent=1 // pred_check
      _
    $region7: #{tpu_custom_call.1} parent=1 // pred_check_branch
      %21 = sbr.rel (0) target = $region9
    $region8: #{tpu_custom_call.1} parent=1 // pred_region
      %s23 = ssub.s32 2048, 2048
      %24 = vsyncadd [#allocation6], %s23
      %s25 = sshll.u32 [#allocation5], 4
      %s26 = int_to_ptr.vmem [resolvable:$true] %s25
      %31 = dma.hbm_to_vmem [thread:$0]  %s1, 2048, %s26, [#allocation6], 128, 128, 8
    $region9: #{tpu_custom_call.1} parent=1 // pred_fallthru
      _
    // Predicated region
    $region10: #{tpu_custom_call.1} parent=1 // pred_check
      _
    $region11: #{tpu_custom_call.1} parent=1 // pred_check_branch
      %33 = sbr.rel (0) target = $region13
    $region12: #{tpu_custom_call.1} parent=1 // pred_region
      %34 = dma.done [#allocation3], 128
    $region13: #{tpu_custom_call.1} parent=1 // pred_fallthru
      _
    // Predicated region
    $region14: #{tpu_custom_call.1} parent=1 // pred_check
      _
    $region15: #{tpu_custom_call.1} parent=1 // pred_check_branch
      %36 = sbr.rel (0) target = $region17
    $region16: #{tpu_custom_call.1} parent=1 // pred_region
      %37 = dma.done [#allocation6], 2048
    $region17: #{tpu_custom_call.1} parent=1 // pred_fallthru
      _
    %v38 = vld [vmem:[#allocation2] sm:$0xff]
    %v39 = vld [vmem:[#allocation5] sm:$0xff]
    %v40 = vld [vmem:[#allocation5 + $0x8] sm:$0xff]
    %v41 = vld [vmem:[#allocation5 + $0x10] sm:$0xff]
    %v42 = vld [vmem:[#allocation5 + $0x18] sm:$0xff]
    %v43 = vld [vmem:[#allocation5 + $0x20] sm:$0xff]
    %v44 = vld [vmem:[#allocation5 + $0x28] sm:$0xff]
    %v45 = vld [vmem:[#allocation5 + $0x30] sm:$0xff]
    %v46 = vld [vmem:[#allocation5 + $0x38] sm:$0xff]
    %v47 = vld [vmem:[#allocation5 + $0x40] sm:$0xff]
    %v48 = vld [vmem:[#allocation5 + $0x48] sm:$0xff]
    %v49 = vld [vmem:[#allocation5 + $0x50] sm:$0xff]
    %v50 = vld [vmem:[#allocation5 + $0x58] sm:$0xff]
    %v51 = vld [vmem:[#allocation5 + $0x60] sm:$0xff]
    %v52 = vld [vmem:[#allocation5 + $0x68] sm:$0xff]
    %v53 = vld [vmem:[#allocation5 + $0x70] sm:$0xff]
    %v54 = vld [vmem:[#allocation5 + $0x78] sm:$0xff]
    %55 = vmatprep.subr.mxu0 0.0
    %56 = vmatpush1.msra.mxu0 %v39
    %57 = vmatprep.subr.mxu0 0.0
    %58 = vmatpush1.msra.mxu0 %v40
    %59 = vmatprep.subr.mxu0 0.0
    %60 = vmatpush1.msra.mxu0 %v41
    %61 = vmatprep.subr.mxu0 0.0
    %62 = vmatpush1.msra.mxu0 %v42
    %63 = vmatprep.subr.mxu0 0.0
    %64 = vmatpush1.msra.mxu0 %v43
    %65 = vmatprep.subr.mxu0 0.0
    %66 = vmatpush1.msra.mxu0 %v44
    %67 = vmatprep.subr.mxu0 0.0
    %68 = vmatpush1.msra.mxu0 %v45
    %69 = vmatprep.subr.mxu0 0.0
    %70 = vmatpush1.msra.mxu0 %v46
    %71 = vmatprep.subr.mxu0 0.0
    %72 = vmatpush1.msra.mxu0 %v47
    %73 = vmatprep.subr.mxu0 0.0
    %74 = vmatpush1.msra.mxu0 %v48
    %75 = vmatprep.subr.mxu0 0.0
    %76 = vmatpush1.msra.mxu0 %v49
    %77 = vmatprep.subr.mxu0 0.0
    %78 = vmatpush1.msra.mxu0 %v50
    %79 = vmatprep.subr.mxu0 0.0
    %80 = vmatpush1.msra.mxu0 %v51
    %81 = vmatprep.subr.mxu0 0.0
    %82 = vmatpush1.msra.mxu0 %v52
    %83 = vmatprep.subr.mxu0 0.0
    %84 = vmatpush1.msra.mxu0 %v53
    %85 = vmatprep.subr.mxu0 0.0
    %86 = vmatpush1.msra.mxu0 %v54
    %87 = vmatprep.subr.mxu0 0.0
    %88 = vmatpush1.msra.mxu0 0.0
    %89 = vmatprep.subr.mxu0 0.0
    %90 = vmatpush1.msra.mxu0 0.0
    %91 = vmatprep.subr.mxu0 0.0
    %92 = vmatpush1.msra.mxu0 0.0
    %93 = vmatprep.subr.mxu0 0.0
    %94 = vmatpush1.msra.mxu0 0.0
    %95 = vmatprep.subr.mxu0 0.0
    %96 = vmatpush1.msra.mxu0 0.0
    %97 = vmatprep.subr.mxu0 0.0
    %98 = vmatpush1.msra.mxu0 0.0
    %99 = vmatprep.subr.mxu0 0.0
    %100 = vmatpush1.msra.mxu0 0.0
    %101 = vmatprep.subr.mxu0 0.0
    %102 = vmatpush1.msra.mxu0 0.0
    %103 = vmatprep.subr.mxu0 0.0
    %104 = vmatpush1.msra.mxu0 0.0
    %105 = vmatprep.subr.mxu0 0.0
    %106 = vmatpush1.msra.mxu0 0.0
    %107 = vmatprep.subr.mxu0 0.0
    %108 = vmatpush1.msra.mxu0 0.0
    %109 = vmatprep.subr.mxu0 0.0
    %110 = vmatpush1.msra.mxu0 0.0
    %111 = vmatprep.subr.mxu0 0.0
    %112 = vmatpush1.msra.mxu0 0.0
    %113 = vmatprep.subr.mxu0 0.0
    %114 = vmatpush1.msra.mxu0 0.0
    %115 = vmatprep.subr.mxu0 0.0
    %116 = vmatpush1.msra.mxu0 0.0
    %117 = vmatprep.subr.mxu0 0.0
    %118 = vmatpush1.msra.mxu0 0.0
    %119 = vmatprep.mubr.f32.mxu0 0.0
    %120 = vmatmul.mubr.f32.gmra.mrb[0].mxu0 %v38
    %v121 = vpop.f32.mrb[0].mxu0
    %v122 = vadd.f32 0.0, %v121
    %v123 = vpop.f32.mrb[0].mxu0
    %124 = vdwg.mxu0
    %125 = vst [vmem:[#allocation7] sm:$0xff] %v122
    // Predicated region
    $region18: #{tpu_custom_call.1} parent=1 // pred_check
      _
    $region19: #{tpu_custom_call.1} parent=1 // pred_check_branch
      %127 = sbr.rel (0) target = $region21
    $region20: #{tpu_custom_call.1} parent=1 // pred_region
      %s129 = ssub.s32 128, 128
      %130 = vsyncadd [#allocation4], %s129
      %s132 = sshll.u32 [#allocation7], 4
      %s133 = int_to_ptr.vmem [resolvable:$true] %s132
      %135 = dma.vmem_to_hbm [thread:$0]  %s133, 128, %s2, [#allocation4]
    $region21: #{tpu_custom_call.1} parent=1 // pred_fallthru
      _
    // Predicated region
    $region22: #{tpu_custom_call.1} parent=1 // pred_check
      _
    $region23: #{tpu_custom_call.1} parent=1 // pred_check_branch
      %137 = sbr.rel (0) target = $region25
    $region24: #{tpu_custom_call.1} parent=1 // pred_region
      %138 = dma.done [#allocation4], 128
    $region25: #{tpu_custom_call.1} parent=1 // pred_fallthru
      _
    %139 = vsyncpa [#allocation3], 1
    %140 = vsyncpa [#allocation6], 1
    %141 = vsyncpa [#allocation4], 1

</llo_original>
